<compile_context>
chip_gen: v6e
topology: v6e:2x2x1
jax: 0.10.0
libtpu: 0.0.40
codegen_flags: <defaults>
</compile_context>

<pallas_src>
import jax
import jax.numpy as jnp
from jax.experimental import pallas as pl
from jax.experimental.pallas import tpu as pltpu

ALPHA = 0.5
GAMMA = 2
IGNORE_INDEX = 255


def _cdiv(a, b):
    return -(-a // b)


def _round_up(x, m):
    return _cdiv(x, m) * m


def _hw_config():
    """Generation-dependent working-set budget, VMEM limit, core-split count."""
    vmem_cap = 128 * 1024 * 1024
    try:
        info = pltpu.get_tpu_info()
        vmem_cap = int(getattr(info, "vmem_capacity_bytes", vmem_cap))
    except Exception:
        pass
    if vmem_cap <= 64 * 1024 * 1024:
        # v7x-class: 64 MiB VMEM per TensorCore, 2 TensorCores per chip.
        return dict(working_set=14 * 1024 * 1024,
                    vmem_limit=40 * 1024 * 1024,
                    num_splits=2)
    # v5e / v6e (or detection unavailable): 128 MiB VMEM, single TensorCore.
    # These values are also safe if a 64 MiB part is mis-detected.
    return dict(working_set=24 * 1024 * 1024,
                vmem_limit=48 * 1024 * 1024,
                num_splits=1)


def _focal_ce_kernel(logits_ref, labels_ref, sum_out_ref, cnt_out_ref,
                     acc_sum, acc_cnt):
    """Accumulates masked per-lane cross-entropy and valid-pixel counts.

    logits_ref : (1, C, TR, 128) float tile  (pixels lane-dense, classes leading)
    labels_ref : (1, TR, 128)    integer tile (native dtype)
    sum_out_ref / cnt_out_ref : (1, 8, 128) f32 per-split partials, written
                                once on the split's last grid step
    acc_sum / acc_cnt : (TR, 128) f32 VMEM scratch accumulators
    """
    b = pl.program_id(1)
    j = pl.program_id(2)

    @pl.when((b == 0) & (j == 0))
    def _():
        acc_sum[...] = jnp.zeros_like(acc_sum)
        acc_cnt[...] = jnp.zeros_like(acc_cnt)

    labels = labels_ref[0].astype(jnp.int32)          # (TR, 128)
    valid = labels != IGNORE_INDEX

    num_classes = logits_ref.shape[1]

    # Running max over classes: pure elementwise VPU maxes on dense slabs.
    m = logits_ref[0, 0].astype(jnp.float32)
    for cls in range(1, num_classes):
        m = jnp.maximum(m, logits_ref[0, cls].astype(jnp.float32))

    # Sum of exp and label-selected (x - m); m cancels out of ce below.
    # IGNORE_INDEX (255) never equals a real class id, so no pre-select needed.
    s = jnp.zeros_like(m)
    sel = jnp.zeros_like(m)
    for cls in range(num_classes):
        d = logits_ref[0, cls].astype(jnp.float32) - m
        s = s + jnp.exp(d)
        sel = sel + jnp.where(labels == cls, d, 0.0)

    ce = jnp.where(valid, jnp.log(s) - sel, 0.0)      # (TR, 128), 0 for masked

    acc_sum[...] = acc_sum[...] + ce
    acc_cnt[...] = acc_cnt[...] + valid.astype(jnp.float32)

    # In-kernel finalize: collapse (TR,128) accumulators to a lane-dense
    # (8,128) partial per split on the last step (cheap vreg adds).
    @pl.when((b == pl.num_programs(1) - 1) & (j == pl.num_programs(2) - 1))
    def _():
        tr = acc_sum.shape[0]
        sum_out_ref[0] = jnp.sum(acc_sum[...].reshape(tr // 8, 8, 128), axis=0)
        cnt_out_ref[0] = jnp.sum(acc_cnt[...].reshape(tr // 8, 8, 128), axis=0)


def focal_loss(preds_nchw, labels_nhw, alpha=ALPHA, gamma=GAMMA):
    """preds_nchw: (N, C, H, W) float; labels_nhw: (N, H, W) int. Returns scalar f32."""
    n, c, h, w = preds_nchw.shape
    hw = h * w
    cfg = _hw_config()
    num_splits = cfg["num_splits"]

    # Native NCHW: pixels already contiguous on the fast axis -> reshapes only.
    logits = preds_nchw.reshape(n, c, hw)
    labels = labels_nhw.reshape(n, hw)
    if not jnp.issubdtype(labels.dtype, jnp.integer):
        labels = labels.astype(jnp.int32)

    logit_bytes = logits.dtype.itemsize
    label_bytes = labels.dtype.itemsize

    rows = _cdiv(hw, 128)            # 128-pixel lane rows per image
    hw_128 = rows * 128

    # Row-tile must respect the sublane packing of both operands' dtypes.
    row_mult = max({2: 16, 1: 32}.get(logit_bytes, 8),
                   {2: 16, 1: 32}.get(label_bytes, 8))

    # Tile sizing: double-buffered logits + labels tiles plus the resident
    # f32 accumulators must fit the per-generation working-set budget.
    per_row = (2 * c * 128 * logit_bytes      # double-buffered logits
               + 2 * 128 * label_bytes        # double-buffered labels
               + 2 * 128 * 4)                 # f32 sum + count scratch
    tr = cfg["working_set"] // per_row
    tr = min(tr, 2048, _round_up(rows, row_mult))
    tr = max(row_mult, tr // row_mult * row_mult)

    tiles_total = _cdiv(rows, tr)
    tiles_padded = _round_up(tiles_total, num_splits)
    tiles_per_split = tiles_padded // num_splits
    max_tile = tiles_total - 1

    # Logits: pad only when H*W is not lane-aligned (avoids the full-array
    # pad copy in the common case).  Row-tile tails are NOT padded; the
    # clamped index_map + IGNORE labels mask any out-of-bounds rows.
    if hw_128 != hw:
        logits = jnp.pad(logits, ((0, 0), (0, 0), (0, hw_128 - hw)))
    logits = logits.reshape(n, c, rows, 128)

    # Labels (tiny): pad to full tile coverage with IGNORE_INDEX so tail /
    # over-allocated rows contribute nothing to the sum or the count.
    lab_pixels = tiles_padded * tr * 128
    if lab_pixels != hw:
        labels = jnp.pad(labels, ((0, 0), (0, lab_pixels - hw)),
                         constant_values=IGNORE_INDEX)
    labels = labels.reshape(n, tiles_padded * tr, 128)

    def logits_map(s, b, j):
        t = s * tiles_per_split + j
        # Clamp so no block starts fully out of bounds; clamped (redundant)
        # tiles read all-IGNORE labels and contribute zero.
        return (b, 0, jnp.minimum(t, max_tile), 0)

    def labels_map(s, b, j):
        return (b, s * tiles_per_split + j, 0)

    grid = (num_splits, n, tiles_per_split)

    sums, cnts = pl.pallas_call(
        _focal_ce_kernel,
        out_shape=(
            jax.ShapeDtypeStruct((num_splits, 8, 128), jnp.float32),
            jax.ShapeDtypeStruct((num_splits, 8, 128), jnp.float32),
        ),
        grid_spec=pltpu.PrefetchScalarGridSpec(
            num_scalar_prefetch=0,
            grid=grid,
            in_specs=[
                pl.BlockSpec((1, c, tr, 128), logits_map),
                pl.BlockSpec((1, tr, 128), labels_map),
            ],
            out_specs=[
                pl.BlockSpec((1, 8, 128), lambda s, b, j: (s, 0, 0)),
                pl.BlockSpec((1, 8, 128), lambda s, b, j: (s, 0, 0)),
            ],
            scratch_shapes=[
                pltpu.VMEM((tr, 128), jnp.float32),
                pltpu.VMEM((tr, 128), jnp.float32),
            ],
        ),
        compiler_params=pltpu.CompilerParams(
            dimension_semantics=("parallel", "arbitrary", "arbitrary"),
            vmem_limit_bytes=cfg["vmem_limit"],
        ),
    )(logits, labels)

    # Tiny final reduction over 2 * num_splits * 8 * 128 partials.
    ce_sum = jnp.sum(sums)
    ce_cnt = jnp.sum(cnts)
    # NOTE: divides by zero (-> NaN) when every pixel is IGNORE_INDEX, which
    # matches PyTorch's CrossEntropyLoss(ignore_index=...) behaviour.
    ce_mean = ce_sum / ce_cnt

    # Scalar focal transform (glue).
    logpt = -ce_mean
    pt = jnp.exp(logpt)
    return -((1.0 - pt) ** gamma) * alpha * logpt


def _reference_focal_loss(preds_nchw, labels_nhw, alpha=ALPHA, gamma=GAMMA):
    """Pure-JAX reference mirroring torch CrossEntropyLoss(ignore_index=255) + focal."""
    n, c, h, w = preds_nchw.shape
    logits = jnp.transpose(preds_nchw, (0, 2, 3, 1)).reshape(-1, c).astype(jnp.float32)
    labels = labels_nhw.reshape(-1).astype(jnp.int32)
    valid = labels != IGNORE_INDEX
    safe = jnp.where(valid, labels, 0)
    logp = jax.nn.log_softmax(logits, axis=-1)
    ce_i = -jnp.take_along_axis(logp, safe[:, None], axis=-1)[:, 0]
    ce = jnp.sum(jnp.where(valid, ce_i, 0.0)) / jnp.sum(valid.astype(jnp.float32))
    logpt = -ce
    pt = jnp.exp(logpt)
    return -((1.0 - pt) ** gamma) * alpha * logpt


if __name__ == "__main__":
    key = jax.random.PRNGKey(0)
    k1, k2, k3 = jax.random.split(key, 3)

    N, C, H, W = 2, 4, 16, 16
    preds = jax.random.normal(k1, (N, C, H, W), dtype=jnp.float32)
    labels = jax.random.randint(k2, (N, H, W), 0, C, dtype=jnp.int32)
    # Sprinkle some ignored pixels (ignore_index=255).
    ignore_mask = jax.random.bernoulli(k3, 0.1, (N, H, W))
    labels = jnp.where(ignore_mask, jnp.int32(IGNORE_INDEX), labels)

    loss = jax.block_until_ready(focal_loss(preds, labels))
    ref = jax.block_until_ready(_reference_focal_loss(preds, labels))

    assert jnp.allclose(loss, ref, rtol=1e-5, atol=1e-6), (loss, ref)
    print("KERNEL_OK")
</pallas_src>

<mosaic_0001>
module attributes {stable_mosaic.version = 11 : i64} {
  func.func @_focal_ce_kernel(%arg0: i32, %arg1: i32, %arg2: i32, %arg3: memref<1x4x8x128xf32, #tpu.memory_space<vmem>>, %arg4: memref<1x8x128xi32, #tpu.memory_space<vmem>>, %arg5: memref<1x8x128xf32, #tpu.memory_space<vmem>>, %arg6: memref<1x8x128xf32, #tpu.memory_space<vmem>>, %arg7: memref<8x128xf32, #tpu.memory_space<vmem>>, %arg8: memref<8x128xf32, #tpu.memory_space<vmem>>) attributes {dimension_semantics = [#tpu.dimension_semantics<parallel>, #tpu.dimension_semantics<arbitrary>, #tpu.dimension_semantics<arbitrary>], iteration_bounds = array<i64: 1, 2, 1>, scalar_prefetch = 0 : i64, scratch_operands = 2 : i64, tpu.core_type = #tpu.core_type<tc>, window_params = [{transform_indices = @transform_0, window_bounds = array<i64: 1, 4, 8, 128>}, {transform_indices = @transform_1, window_bounds = array<i64: 1, 8, 128>}, {transform_indices = @transform_2, window_bounds = array<i64: 1, 8, 128>}, {transform_indices = @transform_3, window_bounds = array<i64: 1, 8, 128>}]} {
    %c0_i32 = arith.constant 0 : i32
    %0 = arith.cmpi eq, %arg1, %c0_i32 : i32
    %c0_i32_0 = arith.constant 0 : i32
    %1 = arith.cmpi eq, %arg2, %c0_i32_0 : i32
    %2 = arith.andi %0, %1 : i1
    %3 = arith.extui %2 : i1 to i32
    %c0_i32_1 = arith.constant 0 : i32
    %4 = arith.cmpi ne, %3, %c0_i32_1 : i32
    scf.if %4 {
      %cst_51 = arith.constant 0.000000e+00 : f32
      %79 = vector.broadcast %cst_51 : f32 to vector<8x128xf32>
      %c0_52 = arith.constant 0 : index
      %c0_53 = arith.constant 0 : index
      %80 = vector.load %arg7[%c0_52, %c0_53] : memref<8x128xf32, #tpu.memory_space<vmem>>, vector<8x128xf32>
      tpu.vector_store %arg7[%c0_52, %c0_53], %79 {strides = array<i32>} : memref<8x128xf32, #tpu.memory_space<vmem>>, vector<8x128xf32>,
      %cst_54 = arith.constant 0.000000e+00 : f32
      %81 = vector.broadcast %cst_54 : f32 to vector<8x128xf32>
      %c0_55 = arith.constant 0 : index
      %c0_56 = arith.constant 0 : index
      %82 = vector.load %arg8[%c0_55, %c0_56] : memref<8x128xf32, #tpu.memory_space<vmem>>, vector<8x128xf32>
      tpu.vector_store %arg8[%c0_55, %c0_56], %81 {strides = array<i32>} : memref<8x128xf32, #tpu.memory_space<vmem>>, vector<8x128xf32>,
    } else {
    }
    %c0 = arith.constant 0 : index
    %c0_2 = arith.constant 0 : index
    %c0_3 = arith.constant 0 : index
    %5 = vector.load %arg4[%c0, %c0_2, %c0_3] : memref<1x8x128xi32, #tpu.memory_space<vmem>>, vector<1x8x128xi32>
    %6 = vector.shape_cast %5 : vector<1x8x128xi32> to vector<8x128xi32>
    %c255_i32 = arith.constant 255 : i32
    %7 = vector.broadcast %c255_i32 : i32 to vector<8x128xi32>
    %8 = arith.cmpi ne, %6, %7 : vector<8x128xi32>
    %c0_4 = arith.constant 0 : index
    %c0_5 = arith.constant 0 : index
    %c0_6 = arith.constant 0 : index
    %c0_7 = arith.constant 0 : index
    %9 = vector.load %arg3[%c0_4, %c0_5, %c0_6, %c0_7] : memref<1x4x8x128xf32, #tpu.memory_space<vmem>>, vector<1x1x8x128xf32>
    %10 = vector.shape_cast %9 : vector<1x1x8x128xf32> to vector<8x128xf32>
    %c0_8 = arith.constant 0 : index
    %c1 = arith.constant 1 : index
    %c0_9 = arith.constant 0 : index
    %c0_10 = arith.constant 0 : index
    %11 = vector.load %arg3[%c0_8, %c1, %c0_9, %c0_10] : memref<1x4x8x128xf32, #tpu.memory_space<vmem>>, vector<1x1x8x128xf32>
    %12 = vector.shape_cast %11 : vector<1x1x8x128xf32> to vector<8x128xf32>
    %13 = arith.maximumf %10, %12 : vector<8x128xf32>
    %c0_11 = arith.constant 0 : index
    %c2 = arith.constant 2 : index
    %c0_12 = arith.constant 0 : index
    %c0_13 = arith.constant 0 : index
    %14 = vector.load %arg3[%c0_11, %c2, %c0_12, %c0_13] : memref<1x4x8x128xf32, #tpu.memory_space<vmem>>, vector<1x1x8x128xf32>
    %15 = vector.shape_cast %14 : vector<1x1x8x128xf32> to vector<8x128xf32>
    %16 = arith.maximumf %13, %15 : vector<8x128xf32>
    %c0_14 = arith.constant 0 : index
    %c3 = arith.constant 3 : index
    %c0_15 = arith.constant 0 : index
    %c0_16 = arith.constant 0 : index
    %17 = vector.load %arg3[%c0_14, %c3, %c0_15, %c0_16] : memref<1x4x8x128xf32, #tpu.memory_space<vmem>>, vector<1x1x8x128xf32>
    %18 = vector.shape_cast %17 : vector<1x1x8x128xf32> to vector<8x128xf32>
    %19 = arith.maximumf %16, %18 : vector<8x128xf32>
    %cst = arith.constant 0.000000e+00 : f32
    %20 = vector.broadcast %cst : f32 to vector<8x128xf32>
    %cst_17 = arith.constant 0.000000e+00 : f32
    %21 = vector.broadcast %cst_17 : f32 to vector<8x128xf32>
    %c0_18 = arith.constant 0 : index
    %c0_19 = arith.constant 0 : index
    %c0_20 = arith.constant 0 : index
    %c0_21 = arith.constant 0 : index
    %22 = vector.load %arg3[%c0_18, %c0_19, %c0_20, %c0_21] : memref<1x4x8x128xf32, #tpu.memory_space<vmem>>, vector<1x1x8x128xf32>
    %23 = vector.shape_cast %22 : vector<1x1x8x128xf32> to vector<8x128xf32>
    %24 = arith.subf %23, %19 : vector<8x128xf32>
    %25 = math.exp %24 : vector<8x128xf32>
    %26 = arith.addf %20, %25 : vector<8x128xf32>
    %c0_i32_22 = arith.constant 0 : i32
    %27 = vector.broadcast %c0_i32_22 : i32 to vector<8x128xi32>
    %28 = arith.cmpi eq, %6, %27 : vector<8x128xi32>
    %cst_23 = arith.constant 0.000000e+00 : f32
    %29 = vector.broadcast %cst_23 : f32 to vector<8x128xf32>
    %30 = arith.select %28, %24, %29 : vector<8x128xi1>, vector<8x128xf32>
    %31 = arith.addf %21, %30 : vector<8x128xf32>
    %c0_24 = arith.constant 0 : index
    %c1_25 = arith.constant 1 : index
    %c0_26 = arith.constant 0 : index
    %c0_27 = arith.constant 0 : index
    %32 = vector.load %arg3[%c0_24, %c1_25, %c0_26, %c0_27] : memref<1x4x8x128xf32, #tpu.memory_space<vmem>>, vector<1x1x8x128xf32>
    %33 = vector.shape_cast %32 : vector<1x1x8x128xf32> to vector<8x128xf32>
    %34 = arith.subf %33, %19 : vector<8x128xf32>
    %35 = math.exp %34 : vector<8x128xf32>
    %36 = arith.addf %26, %35 : vector<8x128xf32>
    %c1_i32 = arith.constant 1 : i32
    %37 = vector.broadcast %c1_i32 : i32 to vector<8x128xi32>
    %38 = arith.cmpi eq, %6, %37 : vector<8x128xi32>
    %cst_28 = arith.constant 0.000000e+00 : f32
    %39 = vector.broadcast %cst_28 : f32 to vector<8x128xf32>
    %40 = arith.select %38, %34, %39 : vector<8x128xi1>, vector<8x128xf32>
    %41 = arith.addf %31, %40 : vector<8x128xf32>
    %c0_29 = arith.constant 0 : index
    %c2_30 = arith.constant 2 : index
    %c0_31 = arith.constant 0 : index
    %c0_32 = arith.constant 0 : index
    %42 = vector.load %arg3[%c0_29, %c2_30, %c0_31, %c0_32] : memref<1x4x8x128xf32, #tpu.memory_space<vmem>>, vector<1x1x8x128xf32>
    %43 = vector.shape_cast %42 : vector<1x1x8x128xf32> to vector<8x128xf32>
    %44 = arith.subf %43, %19 : vector<8x128xf32>
    %45 = math.exp %44 : vector<8x128xf32>
    %46 = arith.addf %36, %45 : vector<8x128xf32>
    %c2_i32 = arith.constant 2 : i32
    %47 = vector.broadcast %c2_i32 : i32 to vector<8x128xi32>
    %48 = arith.cmpi eq, %6, %47 : vector<8x128xi32>
    %cst_33 = arith.constant 0.000000e+00 : f32
    %49 = vector.broadcast %cst_33 : f32 to vector<8x128xf32>
    %50 = arith.select %48, %44, %49 : vector<8x128xi1>, vector<8x128xf32>
    %51 = arith.addf %41, %50 : vector<8x128xf32>
    %c0_34 = arith.constant 0 : index
    %c3_35 = arith.constant 3 : index
    %c0_36 = arith.constant 0 : index
    %c0_37 = arith.constant 0 : index
    %52 = vector.load %arg3[%c0_34, %c3_35, %c0_36, %c0_37] : memref<1x4x8x128xf32, #tpu.memory_space<vmem>>, vector<1x1x8x128xf32>
    %53 = vector.shape_cast %52 : vector<1x1x8x128xf32> to vector<8x128xf32>
    %54 = arith.subf %53, %19 : vector<8x128xf32>
    %55 = math.exp %54 : vector<8x128xf32>
    %56 = arith.addf %46, %55 : vector<8x128xf32>
    %c3_i32 = arith.constant 3 : i32
    %57 = vector.broadcast %c3_i32 : i32 to vector<8x128xi32>
    %58 = arith.cmpi eq, %6, %57 : vector<8x128xi32>
    %cst_38 = arith.constant 0.000000e+00 : f32
    %59 = vector.broadcast %cst_38 : f32 to vector<8x128xf32>
    %60 = arith.select %58, %54, %59 : vector<8x128xi1>, vector<8x128xf32>
    %61 = arith.addf %51, %60 : vector<8x128xf32>
    %62 = math.log %56 : vector<8x128xf32>
    %63 = arith.subf %62, %61 : vector<8x128xf32>
    %cst_39 = arith.constant 0.000000e+00 : f32
    %64 = vector.broadcast %cst_39 : f32 to vector<8x128xf32>
    %65 = arith.select %8, %63, %64 : vector<8x128xi1>, vector<8x128xf32>
    %c0_40 = arith.constant 0 : index
    %c0_41 = arith.constant 0 : index
    %66 = vector.load %arg7[%c0_40, %c0_41] : memref<8x128xf32, #tpu.memory_space<vmem>>, vector<8x128xf32>
    %67 = arith.addf %66, %65 : vector<8x128xf32>
    %c0_42 = arith.constant 0 : index
    %c0_43 = arith.constant 0 : index
    %68 = vector.load %arg7[%c0_42, %c0_43] : memref<8x128xf32, #tpu.memory_space<vmem>>, vector<8x128xf32>
    tpu.vector_store %arg7[%c0_42, %c0_43], %67 {strides = array<i32>} : memref<8x128xf32, #tpu.memory_space<vmem>>, vector<8x128xf32>,
    %c0_44 = arith.constant 0 : index
    %c0_45 = arith.constant 0 : index
    %69 = vector.load %arg8[%c0_44, %c0_45] : memref<8x128xf32, #tpu.memory_space<vmem>>, vector<8x128xf32>
    %70 = arith.extui %8 : vector<8x128xi1> to vector<8x128xi32>
    %71 = arith.sitofp %70 : vector<8x128xi32> to vector<8x128xf32>
    %72 = arith.addf %69, %71 : vector<8x128xf32>
    %c0_46 = arith.constant 0 : index
    %c0_47 = arith.constant 0 : index
    %73 = vector.load %arg8[%c0_46, %c0_47] : memref<8x128xf32, #tpu.memory_space<vmem>>, vector<8x128xf32>
    tpu.vector_store %arg8[%c0_46, %c0_47], %72 {strides = array<i32>} : memref<8x128xf32, #tpu.memory_space<vmem>>, vector<8x128xf32>,
    %c1_i32_48 = arith.constant 1 : i32
    %74 = arith.cmpi eq, %arg1, %c1_i32_48 : i32
    %c0_i32_49 = arith.constant 0 : i32
    %75 = arith.cmpi eq, %arg2, %c0_i32_49 : i32
    %76 = arith.andi %74, %75 : i1
    %77 = arith.extui %76 : i1 to i32
    %c0_i32_50 = arith.constant 0 : i32
    %78 = arith.cmpi ne, %77, %c0_i32_50 : i32
    scf.if %78 {
      %c0_51 = arith.constant 0 : index
      %c0_52 = arith.constant 0 : index
      %79 = vector.load %arg7[%c0_51, %c0_52] : memref<8x128xf32, #tpu.memory_space<vmem>>, vector<8x128xf32>
      %80 = vector.shape_cast %79 : vector<8x128xf32> to vector<1x8x128xf32>
      %cst_53 = arith.constant dense<0.000000e+00> : vector<8x128xf32>
      %81 = vector.multi_reduction <add>, %80, %cst_53 [0] : vector<1x8x128xf32> to vector<8x128xf32>
      %c0_54 = arith.constant 0 : index
      %c0_55 = arith.constant 0 : index
      %c0_56 = arith.constant 0 : index
      %82 = vector.load %arg5[%c0_54, %c0_55, %c0_56] : memref<1x8x128xf32, #tpu.memory_space<vmem>>, vector<1x8x128xf32>
      %83 = vector.shape_cast %82 : vector<1x8x128xf32> to vector<8x128xf32>
      %84 = vector.shape_cast %81 : vector<8x128xf32> to vector<1x8x128xf32>
      tpu.vector_store %arg5[%c0_54, %c0_55, %c0_56], %84 {strides = array<i32>} : memref<1x8x128xf32, #tpu.memory_space<vmem>>, vector<1x8x128xf32>,
      %c0_57 = arith.constant 0 : index
      %c0_58 = arith.constant 0 : index
      %85 = vector.load %arg8[%c0_57, %c0_58] : memref<8x128xf32, #tpu.memory_space<vmem>>, vector<8x128xf32>
      %86 = vector.shape_cast %85 : vector<8x128xf32> to vector<1x8x128xf32>
      %cst_59 = arith.constant dense<0.000000e+00> : vector<8x128xf32>
      %87 = vector.multi_reduction <add>, %86, %cst_59 [0] : vector<1x8x128xf32> to vector<8x128xf32>
      %c0_60 = arith.constant 0 : index
      %c0_61 = arith.constant 0 : index
      %c0_62 = arith.constant 0 : index
      %88 = vector.load %arg6[%c0_60, %c0_61, %c0_62] : memref<1x8x128xf32, #tpu.memory_space<vmem>>, vector<1x8x128xf32>
      %89 = vector.shape_cast %88 : vector<1x8x128xf32> to vector<8x128xf32>
      %90 = vector.shape_cast %87 : vector<8x128xf32> to vector<1x8x128xf32>
      tpu.vector_store %arg6[%c0_60, %c0_61, %c0_62], %90 {strides = array<i32>} : memref<1x8x128xf32, #tpu.memory_space<vmem>>, vector<1x8x128xf32>,
    } else {
    }
    return
  }
  func.func @transform_0(%arg0: i32, %arg1: i32, %arg2: i32) -> (i32, i32, i32, i32) {
    %c1_i32 = arith.constant 1 : i32
    %0 = arith.muli %arg0, %c1_i32 : i32
    %1 = arith.addi %0, %arg2 : i32
    %c0_i32 = arith.constant 0 : i32
    %2 = arith.minsi %1, %c0_i32 : i32
    %c0_i32_0 = arith.constant 0 : i32
    %c0_i32_1 = arith.constant 0 : i32
    %c0_i32_2 = arith.constant 0 : i32
    return %arg1, %c0_i32_0, %2, %c0_i32_1 : i32, i32, i32, i32
  }
  func.func @transform_1(%arg0: i32, %arg1: i32, %arg2: i32) -> (i32, i32, i32) {
    %c1_i32 = arith.constant 1 : i32
    %0 = arith.muli %arg0, %c1_i32 : i32
    %1 = arith.addi %0, %arg2 : i32
    %c0_i32 = arith.constant 0 : i32
    %c0_i32_0 = arith.constant 0 : i32
    return %arg1, %1, %c0_i32 : i32, i32, i32
  }
  func.func @transform_2(%arg0: i32, %arg1: i32, %arg2: i32) -> (i32, i32, i32) {
    %c0_i32 = arith.constant 0 : i32
    %c0_i32_0 = arith.constant 0 : i32
    %c0_i32_1 = arith.constant 0 : i32
    return %arg0, %c0_i32, %c0_i32_0 : i32, i32, i32
  }
  func.func @transform_3(%arg0: i32, %arg1: i32, %arg2: i32) -> (i32, i32, i32) {
    %c0_i32 = arith.constant 0 : i32
    %c0_i32_0 = arith.constant 0 : i32
    %c0_i32_1 = arith.constant 0 : i32
    return %arg0, %c0_i32, %c0_i32_0 : i32, i32, i32
  }
}

</mosaic_0001>

<llo_original>
// kernel: tpu_custom_call.1
$region0: #{tpu_custom_call.1}
  #allocation0 [shape = 'u32[]', space=smem, size = 0x4, offset = 0x4, fixed_abs, tag = 'smem constant byte address 0x4 - core index']
  #allocation1 [shape = 'u32[144,128]{1,0:T(1,128)}', space=vmem, size = 0x12000, scoped, tag = 'internal scratch']
  #allocation2 [shape = 'f32[8,128]{1,0:T(8,128)}', space=vmem, size = 0x1000, scoped, tag = 'scratch operand']
  #allocation3 [shape = 'f32[8,128]{1,0:T(8,128)}', space=vmem, size = 0x1000, scoped, tag = 'scratch operand']
  #allocation12 [shape = 's32[]', space=sflag, size = 0x4, offset = 0, fixed_abs, tag = 'sflag constant byte address 0x0 - dummy sync flag']
  %s0 = inlined_call_operand.hbm [shape: f32[2,4,2,128], index: 0, kind: input, shape index: {}]
  %s1 = inlined_call_operand.hbm [shape: s32[2,8,128], index: 1, kind: input, shape index: {}]
  %s2 = inlined_call_operand.hbm [shape: f32[1,8,128], index: 2, kind: output, shape index: {0}]
  %s3 = inlined_call_operand.hbm [shape: f32[1,8,128], index: 3, kind: output, shape index: {1}]
  %4 = xla_tuple %s2, %s3
  %s5 = sld [smem:[#allocation0]]
  $region65: #{tpu_custom_call.1} parent=0
    _
  %s7 = ssub.s32 1, %s5
  %s8 = scalar_select 0, %s7, %s5
  $region1: #{tpu_custom_call.1} parent=0
    #allocation4 [shape = 'u8[32768]{0}', space=vmem, size = 0x8000, scoped, tag = 'input window, operand 0']
    #allocation5 [shape = 's32[2]{0}', space=sflag, size = 0x8, scoped, tag = 'scoped memory for tpu_custom_call.1']
    #allocation6 [shape = 's32[2]{0}', space=sflag, size = 0x8, scoped, tag = 'scoped memory for tpu_custom_call.1']
    #allocation7 [shape = 'u8[8192]{0}', space=vmem, size = 0x2000, scoped, tag = 'input window, operand 1']
    #allocation8 [shape = 's32[2]{0}', space=sflag, size = 0x8, scoped, tag = 'scoped memory for tpu_custom_call.1']
    #allocation9 [shape = 'u8[4096]{0}', space=vmem, size = 0x1000, scoped, tag = 'output window, operand 0, single buffered']
    #allocation10 [shape = 'u8[4096]{0}', space=vmem, size = 0x1000, scoped, tag = 'output window, operand 1, single buffered']
    #allocation11 [shape = 's32[1]{0}', space=sflag, size = 0x4, scoped, tag = 'scoped memory for tpu_custom_call.1']
    %9 = vsyncpa [#allocation5], 0
    %s10 = scalar_lea.sflag [#allocation5], 1
    %11 = vsyncpa %s10, 0
    %12 = vsyncpa [#allocation8], 0
    %s13 = scalar_lea.sflag [#allocation8], 1
    %14 = vsyncpa %s13, 0
    %15 = vsyncpa [#allocation6], 0
    %16 = vsyncpa [#allocation11], 0
    loop: start=0, step=1, limit=4
    $region2: #{tpu_custom_call.1} parent=1 // loop_pre_header
      _
    $region3: #{tpu_custom_call.1} parent=1 // loop_header
      %s18 = sphi 0, %s22
      %p19 = scmp.ge.s32.totalorder %s18, 4
      %s25 = sphi 0, %s44
      %s26 = sphi 0, %s40
      %s27 = sphi 0, %s36
      %s28 = sphi 0, %s25
      %s29 = sphi 0, %s26
      %s30 = sphi 0, %s27
      %s31 = sphi 0, %s28
      %s32 = sphi 0, %s29
      %s33 = sphi 0, %s30
      %s55 = sphi 0, %s57
      %s58 = sphi 0, %s55
      %s59 = sphi 0, %s58
      %s75 = sphi 0, %s59
      %s85 = sphi 0, %s87
      %s88 = sphi 0, %s85
      %s89 = sphi 0, %s88
      %s105 = sphi 0, %s89
      %s111 = sphi 0, %s113
      %s114 = sphi 0, %s111
      %s115 = sphi 0, %s114
      %s131 = sphi 0, %s115
      %s137 = sphi 0, %s139
      %s140 = sphi 0, %s137
      %s141 = sphi 0, %s140
      %s157 = sphi 0, %s141
    $region4: #{tpu_custom_call.1} parent=1 // loop_header_branch
      %21 = sbr.rel (%p19) target = $region8
    $region5: #{tpu_custom_call.1} parent=1 // loop_body
      %s23 = ssub.s32 %s18, 1
      %s24 = ssub.s32 %s18, 2
      %s34 = sadd.s32 1, %s27
      %p35 = scmp.ge.s32.totalorder %s34, 1
      %s36 = scalar_select %p35, 0, %s34
      %s37 = sadd.s32 1, %s26
      %s38 = scalar_select %p35, %s37, %s26
      %p39 = scmp.ge.s32.totalorder %s38, 2
      %s40 = scalar_select %p39, 0, %s38
      %s41 = sadd.s32 1, %s25
      %s42 = scalar_select %p39, %s41, %s25
      %p43 = scmp.ge.s32.totalorder %s42, 1
      %s44 = scalar_select %p43, 0, %s42
      %s45 = sadd.s32 %s25, %s27
      %p46 = scmp.lt.s32.totalorder %s45, 0
      %s47 = scalar_select %p46, %s45, 0
      %s48 = sadd.s32 %s44, %s36
      %p49 = scmp.lt.s32.totalorder %s48, 0
      %s50 = scalar_select %p49, %s48, 0
      %s51 = ssub.s32 %s26, %s40
      %s52 = ssub.s32 %s47, %s50
      %s53 = sor.u32 %s51, %s52
      %p54 = scmp.eq.s32.totalorder %s53, 0
      %s56 = sadd.s32 %s55, 1
      %s57 = scalar_select %p54, %s55, %s56
      %p60 = pneg %p54
      %p61 = scmp.eq.s32.totalorder %s18, 1
      %p62 = por %p60, %p61
      %p63 = scmp.ne.s32.totalorder %s55, %s58
      %p64 = scmp.eq.s32.totalorder %s18, 0
      %p65 = por %p63, %p64
      %p66 = scmp.ne.s32.totalorder %s55, %s58
      %p67 = scmp.eq.s32.totalorder %s23, 1
      %p68 = por %p66, %p67
      %p69 = scmp.ne.s32.totalorder %s58, %s59
      %p70 = scmp.eq.s32.totalorder %s23, 0
      %p71 = por %p69, %p70
      %p72 = scmp.ne.s32.totalorder %s58, %s59
      %p73 = scmp.eq.s32.totalorder %s24, 1
      %p74 = por %p72, %p73
      %p76 = scmp.ne.s32.totalorder %s59, %s75
      %p77 = scmp.eq.s32.totalorder %s24, 0
      %p78 = por %p76, %p77
      %s79 = sadd.s32 %s25, %s27
      %s80 = sadd.s32 %s44, %s36
      %s81 = ssub.s32 %s26, %s40
      %s82 = ssub.s32 %s79, %s80
      %s83 = sor.u32 %s81, %s82
      %p84 = scmp.eq.s32.totalorder %s83, 0
      %s86 = sadd.s32 %s85, 1
      %s87 = scalar_select %p84, %s85, %s86
      %p90 = pneg %p84
      %p91 = scmp.eq.s32.totalorder %s18, 1
      %p92 = por %p90, %p91
      %p93 = scmp.ne.s32.totalorder %s85, %s88
      %p94 = scmp.eq.s32.totalorder %s18, 0
      %p95 = por %p93, %p94
      %p96 = scmp.ne.s32.totalorder %s85, %s88
      %p97 = scmp.eq.s32.totalorder %s23, 1
      %p98 = por %p96, %p97
      %p99 = scmp.ne.s32.totalorder %s88, %s89
      %p100 = scmp.eq.s32.totalorder %s23, 0
      %p101 = por %p99, %p100
      %p102 = scmp.ne.s32.totalorder %s88, %s89
      %p103 = scmp.eq.s32.totalorder %s24, 1
      %p104 = por %p102, %p103
      %p106 = scmp.ne.s32.totalorder %s89, %s105
      %p107 = scmp.eq.s32.totalorder %s24, 0
      %p108 = por %p106, %p107
      %s109 = ssub.s32 %s25, %s44
      %p110 = scmp.eq.s32.totalorder %s109, 0
      %s112 = sadd.s32 %s111, 1
      %s113 = scalar_select %p110, %s111, %s112
      %p116 = pneg %p110
      %p117 = scmp.eq.s32.totalorder %s18, 1
      %p118 = por %p116, %p117
      %p119 = scmp.ne.s32.totalorder %s111, %s114
      %p120 = scmp.eq.s32.totalorder %s18, 0
      %p121 = por %p119, %p120
      %p122 = scmp.ne.s32.totalorder %s111, %s114
      %p123 = scmp.eq.s32.totalorder %s23, 1
      %p124 = por %p122, %p123
      %p125 = scmp.ne.s32.totalorder %s114, %s115
      %p126 = scmp.eq.s32.totalorder %s23, 0
      %p127 = por %p125, %p126
      %p128 = scmp.ne.s32.totalorder %s114, %s115
      %p129 = scmp.eq.s32.totalorder %s24, 1
      %p130 = por %p128, %p129
      %p132 = scmp.ne.s32.totalorder %s115, %s131
      %p133 = scmp.eq.s32.totalorder %s24, 0
      %p134 = por %p132, %p133
      %s135 = ssub.s32 %s25, %s44
      %p136 = scmp.eq.s32.totalorder %s135, 0
      %s138 = sadd.s32 %s137, 1
      %s139 = scalar_select %p136, %s137, %s138
      %p142 = pneg %p136
      %p143 = scmp.eq.s32.totalorder %s18, 1
      %p144 = por %p142, %p143
      %p145 = scmp.ne.s32.totalorder %s137, %s140
      %p146 = scmp.eq.s32.totalorder %s18, 0
      %p147 = por %p145, %p146
      %p148 = scmp.ne.s32.totalorder %s137, %s140
      %p149 = scmp.eq.s32.totalorder %s23, 1
      %p150 = por %p148, %p149
      %p151 = scmp.ne.s32.totalorder %s140, %s141
      %p152 = scmp.eq.s32.totalorder %s23, 0
      %p153 = por %p151, %p152
      %p154 = scmp.ne.s32.totalorder %s140, %s141
      %p155 = scmp.eq.s32.totalorder %s24, 1
      %p156 = por %p154, %p155
      %p158 = scmp.ne.s32.totalorder %s141, %s157
      %p159 = scmp.eq.s32.totalorder %s24, 0
      %p160 = por %p158, %p159
      %p161 = scmp.le.s32.totalorder 1, %s18
      %p162 = scmp.lt.s32.totalorder %s18, 3
      %p163 = pnand %p161, %p162
      %p164 = pneg %p163
      // Predicated region
      $region9: #{tpu_custom_call.1} parent=5 // pred_check
        _
      $region10: #{tpu_custom_call.1} parent=5 // pred_check_branch
        %166 = sbr.rel (%p163) target = $region12
      $region11: #{tpu_custom_call.1} parent=5 // pred_region
        %s167 = ssub.s32 %s18, 1
      $region12: #{tpu_custom_call.1} parent=5 // pred_fallthru
        _
      %p168 = scmp.lt.s32.totalorder %s18, 2
      // Predicated region
      $region13: #{tpu_custom_call.1} parent=5 // pred_check
        %p169 = pneg %p168
      $region14: #{tpu_custom_call.1} parent=5 // pred_check_branch
        %171 = sbr.rel (%p169) target = $region16
      $region15: #{tpu_custom_call.1} parent=5 // pred_region
        // Predicated region
        $region17: #{tpu_custom_call.1} parent=15 // pred_check
          %p172 = pneg %p65
        $region18: #{tpu_custom_call.1} parent=15 // pred_check_branch
          %174 = sbr.rel (%p172) target = $region20
        $region19: #{tpu_custom_call.1} parent=15 // pred_region
          #allocation13 [shape = 'u32[6]{0}', space=smem, size = 0x18, scoped, tag = 'DMA stride descriptor']
          %s175 = sand.u32 %s55, 1
          %s176 = scalar_lea.sflag [#allocation5], %s175
          %s177 = sand.u32 %s55, 1
          %s178 = smul.addr %s177, 32
          %s179 = scalar_lea.vmem [#allocation4], %s178
          %s180 = sadd.s32 %s25, %s27
          %p181 = scmp.lt.s32.totalorder %s180, 0
          %s182 = scalar_select %p181, %s180, 0
          %s183 = smul.u32 4, %s182
          %s184 = ssub.s32 1, %s183
          %s185 = smul.u32 128, %s184
          %s187 = ssub.s32 512, %s185
          %188 = vsyncadd %s176, %s187
          %p189 = scmp.ne.s32.totalorder 0, %s185
          %s190 = smul.addr %s26, 4
          %s191 = sadd.s32 %s183, %s190
          %s192 = smul.addr %s191, 32
          %s193 = scalar_lea.hbm %s0, %s192
          %s194 = smul.u32 2, %s184
          %s195 = smul.u32 %s194, 4
          %s197 = sshll.u32 1, 14
          %s198 = sxor.u32 4294967295, %s197
          %s200 = sld [smem:[#allocation0]]
          %s201 = sadd.s32 2, %s200
          %s203 = sshll.u32 7, 26
          %s204 = sxor.u32 4294967295, %s203
          %s205 = sand.u32 0, %s204
          %s206 = sshll.u32 %s201, 26
          %s207 = sor.u32 %s205, %s206
          %s208 = sshll.u32 %s179, 4
          %s209 = int_to_ptr.vmem [resolvable:$true] %s208
          %s210 = sshll.u32 %s195, 4
          %215 = sst [smem:[#allocation13]] 32
          %s216 = scalar_lea.smem [#allocation13], 1
          %217 = sst [smem:[%s216]] 128
          %s218 = scalar_lea.smem [#allocation13], 2
          %219 = sst [smem:[%s218]] %s184
          %s220 = scalar_lea.smem [#allocation13], 3
          %221 = sst [smem:[%s220]] 32
          %s222 = scalar_lea.smem [#allocation13], 4
          %223 = sst [smem:[%s222]] 32
          %s224 = scalar_lea.smem [#allocation13], 5
          %225 = sst [smem:[%s224]] 2
          %227 = dma.general (%p189), %s193, %s210, %s209, %s176, 131072, [#allocation13], %s207, 0
        $region20: #{tpu_custom_call.1} parent=15 // pred_fallthru
          _
        // Predicated region
        $region21: #{tpu_custom_call.1} parent=15 // pred_check
          %p228 = pneg %p95
        $region22: #{tpu_custom_call.1} parent=15 // pred_check_branch
          %230 = sbr.rel (%p228) target = $region24
        $region23: #{tpu_custom_call.1} parent=15 // pred_region
          %s231 = sand.u32 %s85, 1
          %s232 = scalar_lea.sflag [#allocation8], %s231
          %s233 = sand.u32 %s85, 1
          %s234 = smul.addr %s233, 8
          %s235 = scalar_lea.vmem [#allocation7], %s234
          %s236 = sadd.s32 %s25, %s27
          %s238 = ssub.s32 128, 128
          %239 = vsyncadd %s232, %s238
          %s240 = sadd.s32 %s236, %s26
          %s241 = smul.addr %s240, 128
          %s242 = scalar_lea.hbm %s1, %s241
          %s244 = sshll.u32 %s235, 4
          %s245 = int_to_ptr.vmem [resolvable:$true] %s244
          %247 = dma.hbm_to_vmem [thread:$0]  %s242, 128, %s245, %s232
        $region24: #{tpu_custom_call.1} parent=15 // pred_fallthru
          _
      $region16: #{tpu_custom_call.1} parent=5 // pred_fallthru
        _
      %p248 = scmp.le.s32.totalorder 1, %s18
      %p249 = scmp.lt.s32.totalorder %s18, 3
      %p250 = pnand %p248, %p249
      %p251 = pneg %p250
      // Predicated region
      $region25: #{tpu_custom_call.1} parent=5 // pred_check
        _
      $region26: #{tpu_custom_call.1} parent=5 // pred_check_branch
        %253 = sbr.rel (%p250) target = $region28
      $region27: #{tpu_custom_call.1} parent=5 // pred_region
        %s254 = ssub.s32 %s18, 1
        %s255 = sand.u32 %s58, 1
        %s256 = scalar_lea.sflag [#allocation5], %s255
        %s257 = sand.u32 %s58, 1
        %s258 = smul.addr %s257, 32
        %s259 = scalar_lea.vmem [#allocation4], %s258
        // Predicated region
        $region29: #{tpu_custom_call.1} parent=27 // pred_check
          %p260 = pneg %p71
        $region30: #{tpu_custom_call.1} parent=27 // pred_check_branch
          %262 = sbr.rel (%p260) target = $region32
        $region31: #{tpu_custom_call.1} parent=27 // pred_region
          %263 = dma.done %s256, 512
        $region32: #{tpu_custom_call.1} parent=27 // pred_fallthru
          _
        %s264 = sand.u32 %s88, 1
        %s265 = scalar_lea.sflag [#allocation8], %s264
        %s266 = sand.u32 %s88, 1
        %s267 = smul.addr %s266, 8
        %s268 = scalar_lea.vmem [#allocation7], %s267
        // Predicated region
        $region33: #{tpu_custom_call.1} parent=27 // pred_check
          %p269 = pneg %p101
        $region34: #{tpu_custom_call.1} parent=27 // pred_check_branch
          %271 = sbr.rel (%p269) target = $region36
        $region35: #{tpu_custom_call.1} parent=27 // pred_region
          %272 = dma.done %s265, 128
        $region36: #{tpu_custom_call.1} parent=27 // pred_fallthru
          _
        %s273 = sand.u32 %s58, 1
        %s274 = scalar_lea.sflag [#allocation5], %s273
        %s275 = sand.u32 %s58, 1
        %s276 = smul.addr %s275, 32
        %s277 = scalar_lea.vmem [#allocation4], %s276
        %p278 = pneg %p71
        %p279 = pneg %p68
        %s280 = sand.u32 %s88, 1
        %s281 = scalar_lea.sflag [#allocation8], %s280
        %s282 = sand.u32 %s88, 1
        %s283 = smul.addr %s282, 8
        %s284 = scalar_lea.vmem [#allocation7], %s283
        %p285 = pneg %p101
        %p286 = pneg %p98
        %p287 = pneg %p127
        %p288 = pneg %p124
        %p289 = pneg %p153
        %p290 = pneg %p150
        %s291 = sadd.s32 %s28, %s30
        %p292 = scmp.lt.s32.totalorder %s291, 0
        %s293 = scalar_select %p292, %s291, 0
        %s294 = smul.u32 4, %s293
        %s295 = ssub.s32 1, %s294
        %s296 = smul.u32 128, %s295
        %s297 = sadd.s32 %s28, %s30
        %p298 = scmp.eq.s32.totalorder %s29, 0
        %p299 = scmp.eq.s32.totalorder %s30, 0
        %p300 = pnand %p298, %p299
        %p301 = pneg %p300
        // Predicated region
        $region37: #{tpu_custom_call.1} parent=27 // pred_check
          _
        $region38: #{tpu_custom_call.1} parent=27 // pred_check_branch
          %303 = sbr.rel (%p300) target = $region40
        $region39: #{tpu_custom_call.1} parent=27 // pred_region
          %304 = vst [vmem:[#allocation2] sm:$0xff] 0.0
          %305 = vst [vmem:[#allocation3] sm:$0xff] 0.0
        $region40: #{tpu_custom_call.1} parent=27 // pred_fallthru
          _
        %v306 = vld [vmem:[%s268] sm:$0xff]
        %vm307 = vcmp.ne.s32.totalorder %v306, 255
        %v308 = vld [vmem:[%s259] sm:$0xff]
        %s309 = scalar_lea.vmem %s259, 8 [#allocation4]
        %v310 = vld [vmem:[%s309] sm:$0xff]
        %v311 = vmax.f32 %v308, %v310
        %s312 = scalar_lea.vmem %s259, 16 [#allocation4]
        %v313 = vld [vmem:[%s312] sm:$0xff]
        %v314 = vmax.f32 %v311, %v313
        %s315 = scalar_lea.vmem %s259, 24 [#allocation4]
        %v316 = vld [vmem:[%s315] sm:$0xff]
        %v317 = vmax.f32 %v314, %v316
        %v318 = vsub.f32 %v308, %v317
        %v319 = vmul.f32 %v318, 1.442695
        %v320 = vpow.pop %v319
        %v321 = vadd.f32 %v320, 0.0
        %vm322 = vcmp.eq.s32.totalorder %v306, 0
        %v323 = vsel %vm322, %v318, 0.0
        %v324 = vadd.f32 %v323, 0.0
        %v325 = vsub.f32 %v310, %v317
        %v326 = vmul.f32 %v325, 1.442695
        %v327 = vpow.pop %v326
        %v328 = vadd.f32 %v321, %v327
        %vm329 = vcmp.eq.s32.totalorder %v306, 1
        %v330 = vsel %vm329, %v325, 0.0
        %v331 = vadd.f32 %v324, %v330
        %v332 = vsub.f32 %v313, %v317
        %v333 = vmul.f32 %v332, 1.442695
        %v334 = vpow.pop %v333
        %v335 = vadd.f32 %v328, %v334
        %vm336 = vcmp.eq.s32.totalorder %v306, 2
        %v337 = vsel %vm336, %v332, 0.0
        %v338 = vadd.f32 %v331, %v337
        %v339 = vsub.f32 %v316, %v317
        %v340 = vmul.f32 %v339, 1.442695
        %v341 = vpow.pop %v340
        %v342 = vadd.f32 %v335, %v341
        %vm343 = vcmp.eq.s32.totalorder %v306, 3
        %v344 = vsel %vm343, %v339, 0.0
        %v345 = vadd.f32 %v338, %v344
        %v346 = vlog2.pop %v342
        %v347 = vmul.f32 %v346, 0.6931472
        %v348 = vsub.f32 %v347, %v345
        %v349 = vsel %vm307, %v348, 0.0
        %v350 = vld [vmem:[#allocation2] sm:$0xff]
        %v351 = vadd.f32 %v350, %v349
        %352 = vst [vmem:[#allocation2] sm:$0xff] %v351
        %v353 = vld [vmem:[#allocation3] sm:$0xff]
        %v354 = vsel %vm307, 1, 0
        %v355 = vcvt.s32.f32 %v354
        %v356 = vadd.f32 %v353, %v355
        %357 = vst [vmem:[#allocation3] sm:$0xff] %v356
        %p358 = scmp.eq.s32.totalorder %s29, 1
        %p359 = pnand %p358, %p299
        %p360 = pneg %p359
        // Predicated region
        $region41: #{tpu_custom_call.1} parent=27 // pred_check
          _
        $region42: #{tpu_custom_call.1} parent=27 // pred_check_branch
          %362 = sbr.rel (%p359) target = $region44
        $region43: #{tpu_custom_call.1} parent=27 // pred_region
          %v363 = vld [vmem:[#allocation2] sm:$0xff]
          %v364 = vadd.f32 %v363, 0.0
          %365 = vst [vmem:[#allocation9] sm:$0xff] %v364
          %v366 = vld [vmem:[#allocation3] sm:$0xff]
          %v367 = vadd.f32 %v366, 0.0
          %368 = vst [vmem:[#allocation10] sm:$0xff] %v367
        $region44: #{tpu_custom_call.1} parent=27 // pred_fallthru
          _
        // Predicated region
        $region45: #{tpu_custom_call.1} parent=27 // pred_check
          %p369 = pneg %p124
        $region46: #{tpu_custom_call.1} parent=27 // pred_check_branch
          %371 = sbr.rel (%p369) target = $region48
        $region47: #{tpu_custom_call.1} parent=27 // pred_region
          %s373 = ssub.s32 128, 128
          %374 = vsyncadd [#allocation6], %s373
          %s375 = smul.addr %s28, 128
          %s376 = scalar_lea.hbm %s2, %s375
          %s378 = sshll.u32 [#allocation9], 4
          %s379 = int_to_ptr.vmem [resolvable:$true] %s378
          %381 = dma.vmem_to_hbm [thread:$0]  %s379, 128, %s376, [#allocation6]
        $region48: #{tpu_custom_call.1} parent=27 // pred_fallthru
          _
        // Predicated region
        $region49: #{tpu_custom_call.1} parent=27 // pred_check
          %p382 = pneg %p150
        $region50: #{tpu_custom_call.1} parent=27 // pred_check_branch
          %384 = sbr.rel (%p382) target = $region52
        $region51: #{tpu_custom_call.1} parent=27 // pred_region
          %s386 = ssub.s32 128, 128
          %387 = vsyncadd [#allocation11], %s386
          %s388 = smul.addr %s28, 128
          %s389 = scalar_lea.hbm %s3, %s388
          %s391 = sshll.u32 [#allocation10], 4
          %s392 = int_to_ptr.vmem [resolvable:$true] %s391
          %394 = dma.vmem_to_hbm [thread:$0]  %s392, 128, %s389, [#allocation11]
        $region52: #{tpu_custom_call.1} parent=27 // pred_fallthru
          _
        // Predicated region
        $region53: #{tpu_custom_call.1} parent=27 // pred_check
          %p395 = pneg %p124
        $region54: #{tpu_custom_call.1} parent=27 // pred_check_branch
          %397 = sbr.rel (%p395) target = $region56
        $region55: #{tpu_custom_call.1} parent=27 // pred_region
          %398 = dma.done [#allocation6], 128
        $region56: #{tpu_custom_call.1} parent=27 // pred_fallthru
          _
        // Predicated region
        $region57: #{tpu_custom_call.1} parent=27 // pred_check
          %p399 = pneg %p150
        $region58: #{tpu_custom_call.1} parent=27 // pred_check_branch
          %401 = sbr.rel (%p399) target = $region60
        $region59: #{tpu_custom_call.1} parent=27 // pred_region
          %402 = dma.done [#allocation11], 128
        $region60: #{tpu_custom_call.1} parent=27 // pred_fallthru
          _
      $region28: #{tpu_custom_call.1} parent=5 // pred_fallthru
        _
      %p403 = scmp.le.s32.totalorder 2, %s18
      // Predicated region
      $region61: #{tpu_custom_call.1} parent=5 // pred_check
        %p404 = pneg %p403
      $region62: #{tpu_custom_call.1} parent=5 // pred_check_branch
        %406 = sbr.rel (%p404) target = $region64
      $region63: #{tpu_custom_call.1} parent=5 // pred_region
        %s407 = ssub.s32 %s18, 2
      $region64: #{tpu_custom_call.1} parent=5 // pred_fallthru
        _
    $region6: #{tpu_custom_call.1} parent=1 // loop_footer
      %s22 = sadd.s32 1, %s18
    $region7: #{tpu_custom_call.1} parent=1 // loop_footer_branch
      %17 = sbr.rel target = $region3
    $region8: #{tpu_custom_call.1} parent=1 // loop_exit
      _
    %408 = vsyncpa [#allocation5], 1
    %s409 = scalar_lea.sflag [#allocation5], 1
    %410 = vsyncpa %s409, 1
    %411 = vsyncpa [#allocation8], 1
    %s412 = scalar_lea.sflag [#allocation8], 1
    %413 = vsyncpa %s412, 1
    %414 = vsyncpa [#allocation6], 1
    %s415 = scalar_lea.sflag [#allocation6], 1
    %416 = vsyncpa %s415, 1
    %417 = vsyncpa [#allocation11], 1

</llo_original>
